<compile_context>
chip_gen: v7x
topology: tpu7x:2x2x1
jax: 0.10.0
libtpu: 0.0.40
codegen_flags: <defaults>
</compile_context>

<pallas_src>
import jax
import jax.numpy as jnp
import numpy as np
from jax.experimental import pallas as pl
from jax.experimental.pallas import tpu as pltpu

CAT_CARDS = [9, 32, 2, 2, 2, 2, 2, 2, 2, 24, 892, 13429, 100343, 224, 60, 13,
             10, 3, 30, 27322]
EMBED_DIMS = [min(50, c // 2 + 1) for c in CAT_CARDS]   # sums to 361
NUMER_DIMS = 1
INPUT_SIZE = sum(EMBED_DIMS) + NUMER_DIMS               # 362
HIDDEN_SIZE = 128                                       # module default
LANE = 128


def _round_up(x, m):
    return ((x + m - 1) // m) * m


def tablstm_kernel(x_ref, wih_ref, bias_ref, wl_ref, bl_ref, out_ref):
    """Fused single-step LSTM cell (zero initial state) + linear head.

    x_ref    : (TB, Dp)   bf16  embeddings + numeric feature, zero-padded to Dp=384
    wih_ref  : (Dp, 3H)   bf16  W_ih^T with the dead forget-gate columns removed;
                                gate order [i | g | o]
    bias_ref : (1, 3H)    f32   (b_ih + b_hh) for gates [i | g | o]
    wl_ref   : (1, H)     f32   linear weight (out_features = 1)
    bl_ref   : (1, 1)     f32   linear bias
    out_ref  : (TB, 1)    f32
    """
    H = wl_ref.shape[1]
    # Single MXU matmul: (TB, Dp) @ (Dp, 3H) with f32 accumulation.
    gates = (jnp.dot(x_ref[...], wih_ref[...],
                     preferred_element_type=jnp.float32)
             + bias_ref[...])                               # (TB, 3H) f32

    i_g = jax.nn.sigmoid(gates[:, 0:H])                     # input gate
    g_g = jnp.tanh(gates[:, H:2 * H])                       # cell candidate
    o_g = jax.nn.sigmoid(gates[:, 2 * H:3 * H])             # output gate

    c = i_g * g_g                                           # (TB, H)  (c0 = 0)
    h = o_g * jnp.tanh(c)                                   # (TB, H)

    # Linear head, out_features = 1: VPU mul + lane reduction (MXU stays free).
    out_ref[...] = (jnp.sum(h * wl_ref[...], axis=-1, keepdims=True)
                    + bl_ref[...])                          # (TB, 1)


def init_params(key, hidden_size=HIDDEN_SIZE):
    """Deterministic synthetic f32 master parameters (shapes match the PyTorch module)."""
    n_cat = len(CAT_CARDS)
    keys = jax.random.split(key, n_cat + 6)
    emb_tables = [0.1 * jax.random.normal(keys[i], (card, dim), jnp.float32)
                  for i, (card, dim) in enumerate(zip(CAT_CARDS, EMBED_DIMS))]
    s = 1.0 / float(hidden_size) ** 0.5
    w_ih = jax.random.uniform(keys[n_cat + 0], (4 * hidden_size, INPUT_SIZE),
                              jnp.float32, -s, s)
    w_hh = jax.random.uniform(keys[n_cat + 1], (4 * hidden_size, hidden_size),
                              jnp.float32, -s, s)
    b_ih = jax.random.uniform(keys[n_cat + 2], (4 * hidden_size,), jnp.float32, -s, s)
    b_hh = jax.random.uniform(keys[n_cat + 3], (4 * hidden_size,), jnp.float32, -s, s)
    w_lin = jax.random.uniform(keys[n_cat + 4], (1, hidden_size), jnp.float32, -s, s)
    b_lin = jax.random.uniform(keys[n_cat + 5], (1,), jnp.float32, -s, s)
    return dict(emb=emb_tables, w_ih=w_ih, w_hh=w_hh, b_ih=b_ih, b_hh=b_hh,
                w_lin=w_lin, b_lin=b_lin)


def pack_params(params):
    """One-time re-pack of the f32 master params into the exact kernel layout.

    Drops the dead forget-gate block, pre-sums the biases, transposes + casts the
    input-projection weight to bf16, zero-pads its row dim to a multiple of 128 and
    stores embedding tables in bf16 so the gather emits x in the MXU dtype directly.
    """
    H = params["w_hh"].shape[1]
    D = params["w_ih"].shape[1]
    Dp = _round_up(D, LANE)                                  # 362 -> 384
    # PyTorch gate order along dim 0 of w_ih / biases: [i | f | g | o].
    keep = jnp.concatenate([jnp.arange(0, H), jnp.arange(2 * H, 4 * H)])  # i, g, o
    w3 = params["w_ih"][keep, :].T                           # (D, 3H) f32
    w3 = jnp.pad(w3, ((0, Dp - D), (0, 0))).astype(jnp.bfloat16)          # (Dp, 3H)
    bias = (params["b_ih"] + params["b_hh"])[keep][None, :]  # (1, 3H) f32
    return dict(
        emb=[t.astype(jnp.bfloat16) for t in params["emb"]],
        w3=w3,
        bias=bias,
        w_lin=params["w_lin"],                               # (1, H) f32
        b_lin=params["b_lin"][None, :],                      # (1, 1) f32
        input_size=D,
        hidden_size=H,
    )


def tab_lstm_forward(packed, cat_inputs, numer_inputs, block_b=2048):
    """cat_inputs: (B, 20) int32; numer_inputs: (B, 1) float -> (B, 1) float32."""
    # TODO(synk): embedding gather is a data-dependent HBM lookup; kept in plain-JAX
    # glue rather than an in-kernel DMA gather.
    B = cat_inputs.shape[0]
    Dp, G3 = packed["w3"].shape
    D = packed["input_size"]
    H = packed["hidden_size"]

    embs = [jnp.take(packed["emb"][col], cat_inputs[:, col], axis=0)
            for col in range(len(CAT_CARDS))]
    parts = embs + [numer_inputs.astype(jnp.bfloat16)]
    if Dp > D:  # lane-align the feature dim; the zero block fuses into the concat
        parts.append(jnp.zeros((B, Dp - D), jnp.bfloat16))
    x = jnp.concatenate(parts, axis=1)                       # (B, Dp) bf16

    # Batch tile: big enough to amortize per-step overhead, but when B fits in one
    # tile split it in two so the "parallel" grid axis can use both v7x TensorCores.
    if B >= 2 * block_b:
        tb = block_b
    else:
        tb = min(block_b, max(8, _round_up(pl.cdiv(B, 2), 8)))
    grid = (pl.cdiv(B, tb),)                                  # partial boundary block OK

    out = pl.pallas_call(
        tablstm_kernel,
        out_shape=jax.ShapeDtypeStruct((B, 1), jnp.float32),
        grid_spec=pltpu.PrefetchScalarGridSpec(
            num_scalar_prefetch=0,
            grid=grid,
            in_specs=[
                pl.BlockSpec((tb, Dp), lambda i: (i, 0)),     # x tile (pipelined)
                pl.BlockSpec((Dp, G3), lambda i: (0, 0)),     # W_ih^T[i|g|o] (resident)
                pl.BlockSpec((1, G3), lambda i: (0, 0)),      # bias          (resident)
                pl.BlockSpec((1, H), lambda i: (0, 0)),       # w_lin         (resident)
                pl.BlockSpec((1, 1), lambda i: (0, 0)),       # b_lin         (resident)
            ],
            out_specs=pl.BlockSpec((tb, 1), lambda i: (i, 0)),
        ),
        compiler_params=pltpu.CompilerParams(
            dimension_semantics=("parallel",),
            vmem_limit_bytes=48 * 1024 * 1024),
    )(x, packed["w3"], packed["bias"], packed["w_lin"], packed["b_lin"])

    return out


def reference_forward(params, cat_inputs, numer_inputs):
    """Pure-JAX f32 reference with the exact PyTorch LSTM semantics (seq_len=1, zero state)."""
    H = params["w_hh"].shape[1]
    embs = [jnp.take(params["emb"][col], cat_inputs[:, col], axis=0)
            for col in range(len(CAT_CARDS))]
    x = jnp.concatenate(embs + [numer_inputs.astype(jnp.float32)], axis=1)
    gates = x @ params["w_ih"].T + params["b_ih"] + params["b_hh"]
    i_g = jax.nn.sigmoid(gates[:, 0:H])
    f_g = jax.nn.sigmoid(gates[:, H:2 * H])                  # dead (c0 = 0), kept for fidelity
    g_g = jnp.tanh(gates[:, 2 * H:3 * H])
    o_g = jax.nn.sigmoid(gates[:, 3 * H:4 * H])
    c = f_g * 0.0 + i_g * g_g
    h = o_g * jnp.tanh(c)
    return h @ params["w_lin"].T + params["b_lin"][None, :]


if __name__ == "__main__":
    key = jax.random.PRNGKey(0)
    pkey, dkey = jax.random.split(key)
    params = init_params(pkey)
    packed = pack_params(params)

    B = 8
    dkeys = jax.random.split(dkey, len(CAT_CARDS) + 1)
    cat_cols = [jax.random.randint(dkeys[i], (B,), 0, CAT_CARDS[i], dtype=jnp.int32)
                for i in range(len(CAT_CARDS))]
    cat_inputs = jnp.stack(cat_cols, axis=1)                  # (B, 20) int32
    numer_inputs = jax.random.normal(dkeys[-1], (B, NUMER_DIMS), jnp.float32)

    y = tab_lstm_forward(packed, cat_inputs, numer_inputs)
    y = jax.block_until_ready(y)
    assert y.shape == (B, 1) and y.dtype == jnp.float32

    y_ref = jax.block_until_ready(reference_forward(params, cat_inputs, numer_inputs))
    assert np.all(np.isfinite(np.asarray(y)))
    np.testing.assert_allclose(np.asarray(y), np.asarray(y_ref), rtol=5e-2, atol=5e-2)
    print("KERNEL_OK")
</pallas_src>

<mosaic_0001>
module attributes {stable_mosaic.version = 11 : i64} {
  func.func @tablstm_kernel(%arg0: i32, %arg1: memref<8x384xbf16, #tpu.memory_space<vmem>>, %arg2: memref<384x384xbf16, #tpu.memory_space<vmem>>, %arg3: memref<1x384xf32, #tpu.memory_space<vmem>>, %arg4: memref<1x128xf32, #tpu.memory_space<vmem>>, %arg5: memref<1x1xf32, #tpu.memory_space<vmem>>, %arg6: memref<8x1xf32, #tpu.memory_space<vmem>>) attributes {dimension_semantics = [#tpu.dimension_semantics<parallel>], iteration_bounds = array<i64: 1>, scalar_prefetch = 0 : i64, scratch_operands = 0 : i64, tpu.core_type = #tpu.core_type<tc>, window_params = [{transform_indices = @transform_0, window_bounds = array<i64: 8, 384>}, {pipeline_mode = #tpu.pipeline_mode<synchronous>, transform_indices = @transform_1, window_bounds = array<i64: 384, 384>}, {pipeline_mode = #tpu.pipeline_mode<synchronous>, transform_indices = @transform_2, window_bounds = array<i64: 1, 384>}, {pipeline_mode = #tpu.pipeline_mode<synchronous>, transform_indices = @transform_3, window_bounds = array<i64: 1, 128>}, {pipeline_mode = #tpu.pipeline_mode<synchronous>, transform_indices = @transform_4, window_bounds = array<i64: 1, 1>}, {transform_indices = @transform_5, window_bounds = array<i64: 8, 1>}]} {
    %c0 = arith.constant 0 : index
    %c0_0 = arith.constant 0 : index
    %0 = vector.load %arg1[%c0, %c0_0] : memref<8x384xbf16, #tpu.memory_space<vmem>>, vector<8x384xbf16>
    %c0_1 = arith.constant 0 : index
    %c0_2 = arith.constant 0 : index
    %1 = vector.load %arg2[%c0_1, %c0_2] : memref<384x384xbf16, #tpu.memory_space<vmem>>, vector<384x384xbf16>
    %cst = arith.constant dense<0.000000e+00> : vector<8x384xf32>
    %2 = tpu.matmul %0, %1, %cst {dimension_numbers = #tpu.dot_dimension_numbers<[1], [0], [0], [1], [0, 0, 1, 1], [], []>} : vector<8x384xbf16>, vector<384x384xbf16>, vector<8x384xf32> -> vector<8x384xf32>
    %c0_3 = arith.constant 0 : index
    %c0_4 = arith.constant 0 : index
    %3 = vector.load %arg3[%c0_3, %c0_4] : memref<1x384xf32, #tpu.memory_space<vmem>>, vector<1x384xf32>
    %4 = vector.broadcast %3 : vector<1x384xf32> to vector<8x384xf32>
    %5 = arith.addf %2, %4 : vector<8x384xf32>
    %6 = vector.extract_strided_slice %5 {offsets = [0, 0], sizes = [8, 128], strides = [1, 1]} : vector<8x384xf32> to vector<8x128xf32>
    %7 = arith.negf %6 : vector<8x128xf32>
    %8 = math.exp %7 : vector<8x128xf32>
    %cst_5 = arith.constant 1.000000e+00 : f32
    %9 = vector.broadcast %cst_5 : f32 to vector<8x128xf32>
    %10 = arith.addf %9, %8 : vector<8x128xf32>
    %11 = arith.divf %9, %10 : vector<8x128xf32>
    %12 = vector.extract_strided_slice %5 {offsets = [0, 128], sizes = [8, 128], strides = [1, 1]} : vector<8x384xf32> to vector<8x128xf32>
    %13 = math.tanh %12 : vector<8x128xf32>
    %14 = vector.extract_strided_slice %5 {offsets = [0, 256], sizes = [8, 128], strides = [1, 1]} : vector<8x384xf32> to vector<8x128xf32>
    %15 = arith.negf %14 : vector<8x128xf32>
    %16 = math.exp %15 : vector<8x128xf32>
    %cst_6 = arith.constant 1.000000e+00 : f32
    %17 = vector.broadcast %cst_6 : f32 to vector<8x128xf32>
    %18 = arith.addf %17, %16 : vector<8x128xf32>
    %19 = arith.divf %17, %18 : vector<8x128xf32>
    %20 = arith.mulf %11, %13 : vector<8x128xf32>
    %21 = math.tanh %20 : vector<8x128xf32>
    %22 = arith.mulf %19, %21 : vector<8x128xf32>
    %c0_7 = arith.constant 0 : index
    %c0_8 = arith.constant 0 : index
    %23 = vector.load %arg4[%c0_7, %c0_8] : memref<1x128xf32, #tpu.memory_space<vmem>>, vector<1x128xf32>
    %24 = vector.broadcast %23 : vector<1x128xf32> to vector<8x128xf32>
    %25 = arith.mulf %22, %24 : vector<8x128xf32>
    %cst_9 = arith.constant dense<0.000000e+00> : vector<8xf32>
    %26 = vector.multi_reduction <add>, %25, %cst_9 [1] : vector<8x128xf32> to vector<8xf32>
    %27 = vector.shape_cast %26 : vector<8xf32> to vector<8x1xf32>
    %c0_10 = arith.constant 0 : index
    %c0_11 = arith.constant 0 : index
    %28 = vector.load %arg5[%c0_10, %c0_11] : memref<1x1xf32, #tpu.memory_space<vmem>>, vector<1x1xf32>
    %29 = vector.broadcast %28 : vector<1x1xf32> to vector<8x1xf32>
    %30 = arith.addf %27, %29 : vector<8x1xf32>
    %c0_12 = arith.constant 0 : index
    %c0_13 = arith.constant 0 : index
    %31 = vector.load %arg6[%c0_12, %c0_13] : memref<8x1xf32, #tpu.memory_space<vmem>>, vector<8x1xf32>
    tpu.vector_store %arg6[%c0_12, %c0_13], %30 {strides = array<i32>} : memref<8x1xf32, #tpu.memory_space<vmem>>, vector<8x1xf32>,
    return
  }
  func.func @transform_0(%arg0: i32) -> (i32, i32) {
    %c0_i32 = arith.constant 0 : i32
    %c0_i32_0 = arith.constant 0 : i32
    return %arg0, %c0_i32 : i32, i32
  }
  func.func @transform_1(%arg0: i32) -> (i32, i32) {
    %c0_i32 = arith.constant 0 : i32
    %c0_i32_0 = arith.constant 0 : i32
    %c0_i32_1 = arith.constant 0 : i32
    return %c0_i32, %c0_i32_0 : i32, i32
  }
  func.func @transform_2(%arg0: i32) -> (i32, i32) {
    %c0_i32 = arith.constant 0 : i32
    %c0_i32_0 = arith.constant 0 : i32
    %c0_i32_1 = arith.constant 0 : i32
    return %c0_i32, %c0_i32_0 : i32, i32
  }
  func.func @transform_3(%arg0: i32) -> (i32, i32) {
    %c0_i32 = arith.constant 0 : i32
    %c0_i32_0 = arith.constant 0 : i32
    %c0_i32_1 = arith.constant 0 : i32
    return %c0_i32, %c0_i32_0 : i32, i32
  }
  func.func @transform_4(%arg0: i32) -> (i32, i32) {
    %c0_i32 = arith.constant 0 : i32
    %c0_i32_0 = arith.constant 0 : i32
    %c0_i32_1 = arith.constant 0 : i32
    return %c0_i32, %c0_i32_0 : i32, i32
  }
  func.func @transform_5(%arg0: i32) -> (i32, i32) {
    %c0_i32 = arith.constant 0 : i32
    %c0_i32_0 = arith.constant 0 : i32
    return %arg0, %c0_i32 : i32, i32
  }
}

</mosaic_0001>

<llo_original>
// kernel: tpu_custom_call.1
$region0: #{tpu_custom_call.1}
  #allocation0 [shape = 'u32[]', space=smem, size = 0x4, offset = 0x4, fixed_abs, tag = 'smem constant byte address 0x4 - core index']
  #allocation1 [shape = 'u32[144,128]{1,0:T(1,128)}', space=vmem, size = 0x12000, scoped, tag = 'internal scratch']
  #allocation2 [shape = 'f32[1,1]{1,0:T(1,128)S(1)}', space=vmem, size = 0x200, scoped, tag = 'scoped memory for tpu_custom_call.1']
  %s0 = inlined_call_operand.hbm [shape: bf16[8,384], index: 0, kind: input, shape index: {}]
  %s1 = inlined_call_operand.hbm [shape: bf16[384,384], index: 1, kind: input, shape index: {}]
  %s2 = inlined_call_operand.vmem [shape: f32[1,384], index: 2, kind: input, shape index: {}]
  %s3 = inlined_call_operand.vmem [shape: f32[1,128], index: 3, kind: input, shape index: {}]
  %s4 = inlined_call_operand.<no memory space> [shape: f32[1,1], index: 4, kind: input, shape index: {}]
  %s5 = inlined_call_operand.vmem [shape: f32[8,1], index: 5, kind: output, shape index: {}]
  %s6 = sld [smem:[#allocation0]]
  $region38: #{tpu_custom_call.1} parent=0
    _
  %s8 = ssub.s32 1, %s6
  %s9 = scalar_select 0, %s8, %s6
  %v10 = vstv %s4
  %11 = vst [vmem:[#allocation2] sm:$0x1] %v10
  $region1: #{tpu_custom_call.1} parent=0
    #allocation3 [shape = 'u8[6144]{0}', space=vmem, size = 0x1800, scoped, tag = 'input window, operand 0, single buffered']
    #allocation4 [shape = 's32[1]{0}', space=sflag, size = 0x4, scoped, tag = 'scoped memory for tpu_custom_call.1']
    #allocation5 [shape = 'u8[294912]{0}', space=vmem, size = 0x48000, scoped, tag = 'input window, operand 1, single buffered']
    #allocation6 [shape = 's32[1]{0}', space=sflag, size = 0x4, scoped, tag = 'scoped memory for tpu_custom_call.1']
    %12 = vsyncpa [#allocation4], 0
    %13 = vsyncpa [#allocation6], 0
    // Predicated region
    $region2: #{tpu_custom_call.1} parent=1 // pred_check
      _
    $region3: #{tpu_custom_call.1} parent=1 // pred_check_branch
      %15 = sbr.rel (0) target = $region5
    $region4: #{tpu_custom_call.1} parent=1 // pred_region
      %s17 = ssub.s32 192, 192
      %18 = vsyncadd [#allocation4], %s17
      %s20 = sshll.u32 [#allocation3], 4
      %s21 = int_to_ptr.vmem [resolvable:$true] %s20
      %23 = dma.hbm_to_vmem [thread:$0]  %s0, 192, %s21, [#allocation4]
    $region5: #{tpu_custom_call.1} parent=1 // pred_fallthru
      _
    // Predicated region
    $region6: #{tpu_custom_call.1} parent=1 // pred_check
      _
    $region7: #{tpu_custom_call.1} parent=1 // pred_check_branch
      %25 = sbr.rel (0) target = $region9
    $region8: #{tpu_custom_call.1} parent=1 // pred_region
      %s27 = ssub.s32 9216, 9216
      %28 = vsyncadd [#allocation6], %s27
      %s29 = sshll.u32 [#allocation5], 4
      %s30 = int_to_ptr.vmem [resolvable:$true] %s29
      %35 = dma.hbm_to_vmem [thread:$0]  %s1, 9216, %s30, [#allocation6], 192, 192, 12
    $region9: #{tpu_custom_call.1} parent=1 // pred_fallthru
      _
    // Predicated region
    $region10: #{tpu_custom_call.1} parent=1 // pred_check
      _
    $region11: #{tpu_custom_call.1} parent=1 // pred_check_branch
      %37 = sbr.rel (0) target = $region13
    $region12: #{tpu_custom_call.1} parent=1 // pred_region
      _
    $region13: #{tpu_custom_call.1} parent=1 // pred_fallthru
      _
    // Predicated region
    $region14: #{tpu_custom_call.1} parent=1 // pred_check
      _
    $region15: #{tpu_custom_call.1} parent=1 // pred_check_branch
      %39 = sbr.rel (0) target = $region17
    $region16: #{tpu_custom_call.1} parent=1 // pred_region
      _
    $region17: #{tpu_custom_call.1} parent=1 // pred_fallthru
      _
    // Predicated region
    $region18: #{tpu_custom_call.1} parent=1 // pred_check
      _
    $region19: #{tpu_custom_call.1} parent=1 // pred_check_branch
      %41 = sbr.rel (0) target = $region21
    $region20: #{tpu_custom_call.1} parent=1 // pred_region
      _
    $region21: #{tpu_custom_call.1} parent=1 // pred_fallthru
      _
    // Predicated region
    $region22: #{tpu_custom_call.1} parent=1 // pred_check
      _
    $region23: #{tpu_custom_call.1} parent=1 // pred_check_branch
      %43 = sbr.rel (0) target = $region25
    $region24: #{tpu_custom_call.1} parent=1 // pred_region
      %44 = dma.done [#allocation4], 192
    $region25: #{tpu_custom_call.1} parent=1 // pred_fallthru
      _
    // Predicated region
    $region26: #{tpu_custom_call.1} parent=1 // pred_check
      _
    $region27: #{tpu_custom_call.1} parent=1 // pred_check_branch
      %46 = sbr.rel (0) target = $region29
    $region28: #{tpu_custom_call.1} parent=1 // pred_region
      %47 = dma.done [#allocation6], 9216
    $region29: #{tpu_custom_call.1} parent=1 // pred_fallthru
      _
    %v49 = vld [vmem:[#allocation3] sm:$0xff]
    %v50 = vld [vmem:[#allocation3 + $0x8] sm:$0xf]
    %v51 = vld [vmem:[#allocation5] sm:$0xff]
    %v52 = vld [vmem:[#allocation5 + $0x8] sm:$0xf]
    %v53 = vld [vmem:[#allocation5 + $0xc] sm:$0xff]
    %v54 = vld [vmem:[#allocation5 + $0x14] sm:$0xf]
    %v55 = vld [vmem:[#allocation5 + $0x18] sm:$0xff]
    %v56 = vld [vmem:[#allocation5 + $0x20] sm:$0xf]
    %v57 = vld [vmem:[#allocation5 + $0x24] sm:$0xff]
    %v58 = vld [vmem:[#allocation5 + $0x2c] sm:$0xf]
    %v59 = vld [vmem:[#allocation5 + $0x30] sm:$0xff]
    %v60 = vld [vmem:[#allocation5 + $0x38] sm:$0xf]
    %v61 = vld [vmem:[#allocation5 + $0x3c] sm:$0xff]
    %v62 = vld [vmem:[#allocation5 + $0x44] sm:$0xf]
    %v63 = vld [vmem:[#allocation5 + $0x48] sm:$0xff]
    %v64 = vld [vmem:[#allocation5 + $0x50] sm:$0xf]
    %v65 = vld [vmem:[#allocation5 + $0x54] sm:$0xff]
    %v66 = vld [vmem:[#allocation5 + $0x5c] sm:$0xf]
    %v67 = vld [vmem:[#allocation5 + $0x60] sm:$0xff]
    %v68 = vld [vmem:[#allocation5 + $0x68] sm:$0xf]
    %v69 = vld [vmem:[#allocation5 + $0x6c] sm:$0xff]
    %v70 = vld [vmem:[#allocation5 + $0x74] sm:$0xf]
    %v71 = vld [vmem:[#allocation5 + $0x78] sm:$0xff]
    %v72 = vld [vmem:[#allocation5 + $0x80] sm:$0xf]
    %v73 = vld [vmem:[#allocation5 + $0x84] sm:$0xff]
    %v74 = vld [vmem:[#allocation5 + $0x8c] sm:$0xf]
    %v75 = vld [vmem:[#allocation5 + $0x90] sm:$0xff]
    %v76 = vld [vmem:[#allocation5 + $0x98] sm:$0xf]
    %v77 = vld [vmem:[#allocation5 + $0x9c] sm:$0xff]
    %v78 = vld [vmem:[#allocation5 + $0xa4] sm:$0xf]
    %v79 = vld [vmem:[#allocation5 + $0xa8] sm:$0xff]
    %v80 = vld [vmem:[#allocation5 + $0xb0] sm:$0xf]
    %v81 = vld [vmem:[#allocation5 + $0xb4] sm:$0xff]
    %v82 = vld [vmem:[#allocation5 + $0xbc] sm:$0xf]
    %v83 = vld [vmem:[#allocation5 + $0xc0] sm:$0xff]
    %v84 = vld [vmem:[#allocation5 + $0xc8] sm:$0xf]
    %v85 = vld [vmem:[#allocation5 + $0xcc] sm:$0xff]
    %v86 = vld [vmem:[#allocation5 + $0xd4] sm:$0xf]
    %v87 = vld [vmem:[#allocation5 + $0xd8] sm:$0xff]
    %v88 = vld [vmem:[#allocation5 + $0xe0] sm:$0xf]
    %v89 = vld [vmem:[#allocation5 + $0xe4] sm:$0xff]
    %v90 = vld [vmem:[#allocation5 + $0xec] sm:$0xf]
    %v91 = vld [vmem:[#allocation5 + $0xf0] sm:$0xff]
    %v92 = vld [vmem:[#allocation5 + $0xf8] sm:$0xf]
    %v93 = vld [vmem:[#allocation5 + $0xfc] sm:$0xff]
    %v94 = vld [vmem:[#allocation5 + $0x104] sm:$0xf]
    %v95 = vld [vmem:[#allocation5 + $0x108] sm:$0xff]
    %v96 = vld [vmem:[#allocation5 + $0x110] sm:$0xf]
    %v97 = vld [vmem:[#allocation5 + $0x114] sm:$0xff]
    %v98 = vld [vmem:[#allocation5 + $0x11c] sm:$0xf]
    %v99 = vld [vmem:[#allocation5 + $0x120] sm:$0xff]
    %v100 = vld [vmem:[#allocation5 + $0x128] sm:$0xf]
    %v101 = vld [vmem:[#allocation5 + $0x12c] sm:$0xff]
    %v102 = vld [vmem:[#allocation5 + $0x134] sm:$0xf]
    %v103 = vld [vmem:[#allocation5 + $0x138] sm:$0xff]
    %v104 = vld [vmem:[#allocation5 + $0x140] sm:$0xf]
    %v105 = vld [vmem:[#allocation5 + $0x144] sm:$0xff]
    %v106 = vld [vmem:[#allocation5 + $0x14c] sm:$0xf]
    %v107 = vld [vmem:[#allocation5 + $0x150] sm:$0xff]
    %v108 = vld [vmem:[#allocation5 + $0x158] sm:$0xf]
    %v109 = vld [vmem:[#allocation5 + $0x15c] sm:$0xff]
    %v110 = vld [vmem:[#allocation5 + $0x164] sm:$0xf]
    %v111 = vld [vmem:[#allocation5 + $0x168] sm:$0xff]
    %v112 = vld [vmem:[#allocation5 + $0x170] sm:$0xf]
    %v113 = vld [vmem:[#allocation5 + $0x174] sm:$0xff]
    %v114 = vld [vmem:[#allocation5 + $0x17c] sm:$0xf]
    %v115 = vld [vmem:[#allocation5 + $0x180] sm:$0xff]
    %v116 = vld [vmem:[#allocation5 + $0x188] sm:$0xf]
    %v117 = vld [vmem:[#allocation5 + $0x18c] sm:$0xff]
    %v118 = vld [vmem:[#allocation5 + $0x194] sm:$0xf]
    %v119 = vld [vmem:[#allocation5 + $0x198] sm:$0xff]
    %v120 = vld [vmem:[#allocation5 + $0x1a0] sm:$0xf]
    %v121 = vld [vmem:[#allocation5 + $0x1a4] sm:$0xff]
    %v122 = vld [vmem:[#allocation5 + $0x1ac] sm:$0xf]
    %v123 = vld [vmem:[#allocation5 + $0x1b0] sm:$0xff]
    %v124 = vld [vmem:[#allocation5 + $0x1b8] sm:$0xf]
    %v125 = vld [vmem:[#allocation5 + $0x1bc] sm:$0xff]
    %v126 = vld [vmem:[#allocation5 + $0x1c4] sm:$0xf]
    %v127 = vld [vmem:[#allocation5 + $0x1c8] sm:$0xff]
    %v128 = vld [vmem:[#allocation5 + $0x1d0] sm:$0xf]
    %v129 = vld [vmem:[#allocation5 + $0x1d4] sm:$0xff]
    %v130 = vld [vmem:[#allocation5 + $0x1dc] sm:$0xf]
    %v131 = vld [vmem:[#allocation5 + $0x1e0] sm:$0xff]
    %v132 = vld [vmem:[#allocation5 + $0x1e8] sm:$0xf]
    %v133 = vld [vmem:[#allocation5 + $0x1ec] sm:$0xff]
    %v134 = vld [vmem:[#allocation5 + $0x1f4] sm:$0xf]
    %v135 = vld [vmem:[#allocation5 + $0x1f8] sm:$0xff]
    %v136 = vld [vmem:[#allocation5 + $0x200] sm:$0xf]
    %v137 = vld [vmem:[#allocation5 + $0x204] sm:$0xff]
    %v138 = vld [vmem:[#allocation5 + $0x20c] sm:$0xf]
    %v139 = vld [vmem:[#allocation5 + $0x210] sm:$0xff]
    %v140 = vld [vmem:[#allocation5 + $0x218] sm:$0xf]
    %v141 = vld [vmem:[#allocation5 + $0x21c] sm:$0xff]
    %v142 = vld [vmem:[#allocation5 + $0x224] sm:$0xf]
    %v143 = vld [vmem:[#allocation5 + $0x228] sm:$0xff]
    %v144 = vld [vmem:[#allocation5 + $0x230] sm:$0xf]
    %v145 = vld [vmem:[#allocation5 + $0x234] sm:$0xff]
    %v146 = vld [vmem:[#allocation5 + $0x23c] sm:$0xf]
    %v147 = vld [vmem:[%s2] sm:$0x7]
    %v149 = vlaneseq
    %v150 = vshrl.u32 %v149, 7
    %v151 = vsub.s32 0, %v150
    %v152 = vrot.slane %v147, %v151
    %v153 = vlaneseq
    %v154 = vshrl.u32 %v153, 7
    %v155 = vsub.s32 1, %v154
    %v156 = vrot.slane %v147, %v155
    %v157 = vlaneseq
    %v158 = vshrl.u32 %v157, 7
    %v159 = vsub.s32 2, %v158
    %v160 = vrot.slane %v147, %v159
    %v166 = vunpack.c.l.b16 %v49
    %v167 = vunpack.c.h.b16 %v49
    %v168 = vunpack.c.l.b16 %v50
    %v169 = vpack.c.b16 %v166, %v166
    %v170 = vpack.c.b16 %v167, %v167
    %v171 = vpack.c.b16 %v168, %v168
    %v271 = vunpack.c.l.b16 %v51
    %v272 = vunpack.c.h.b16 %v51
    %v273 = vunpack.c.l.b16 %v52
    %v274 = vunpack.c.l.b16 %v53
    %v275 = vunpack.c.h.b16 %v53
    %v276 = vunpack.c.l.b16 %v54
    %v277 = vunpack.c.l.b16 %v55
    %v278 = vunpack.c.h.b16 %v55
    %v279 = vunpack.c.l.b16 %v56
    %v280 = vunpack.c.l.b16 %v57
    %v281 = vunpack.c.h.b16 %v57
    %v282 = vunpack.c.l.b16 %v58
    %v283 = vunpack.c.l.b16 %v59
    %v284 = vunpack.c.h.b16 %v59
    %v285 = vunpack.c.l.b16 %v60
    %v286 = vunpack.c.l.b16 %v61
    %v287 = vunpack.c.h.b16 %v61
    %v288 = vunpack.c.l.b16 %v62
    %v289 = vunpack.c.l.b16 %v63
    %v290 = vunpack.c.h.b16 %v63
    %v291 = vunpack.c.l.b16 %v64
    %v292 = vunpack.c.l.b16 %v65
    %v293 = vunpack.c.h.b16 %v65
    %v294 = vunpack.c.l.b16 %v66
    %v295 = vunpack.c.l.b16 %v67
    %v296 = vunpack.c.h.b16 %v67
    %v297 = vunpack.c.l.b16 %v68
    %v298 = vunpack.c.l.b16 %v69
    %v299 = vunpack.c.h.b16 %v69
    %v300 = vunpack.c.l.b16 %v70
    %v301 = vunpack.c.l.b16 %v71
    %v302 = vunpack.c.h.b16 %v71
    %v303 = vunpack.c.l.b16 %v72
    %v304 = vunpack.c.l.b16 %v73
    %v305 = vunpack.c.h.b16 %v73
    %v306 = vunpack.c.l.b16 %v74
    %v307 = vunpack.c.l.b16 %v75
    %v308 = vunpack.c.h.b16 %v75
    %v309 = vunpack.c.l.b16 %v76
    %v310 = vunpack.c.l.b16 %v77
    %v311 = vunpack.c.h.b16 %v77
    %v312 = vunpack.c.l.b16 %v78
    %v313 = vunpack.c.l.b16 %v79
    %v314 = vunpack.c.h.b16 %v79
    %v315 = vunpack.c.l.b16 %v80
    %v316 = vunpack.c.l.b16 %v81
    %v317 = vunpack.c.h.b16 %v81
    %v318 = vunpack.c.l.b16 %v82
    %v319 = vunpack.c.l.b16 %v83
    %v320 = vunpack.c.h.b16 %v83
    %v321 = vunpack.c.l.b16 %v84
    %v322 = vunpack.c.l.b16 %v85
    %v323 = vunpack.c.h.b16 %v85
    %v324 = vunpack.c.l.b16 %v86
    %v325 = vunpack.c.l.b16 %v87
    %v326 = vunpack.c.h.b16 %v87
    %v327 = vunpack.c.l.b16 %v88
    %v328 = vunpack.c.l.b16 %v89
    %v329 = vunpack.c.h.b16 %v89
    %v330 = vunpack.c.l.b16 %v90
    %v331 = vunpack.c.l.b16 %v91
    %v332 = vunpack.c.h.b16 %v91
    %v333 = vunpack.c.l.b16 %v92
    %v334 = vunpack.c.l.b16 %v93
    %v335 = vunpack.c.h.b16 %v93
    %v336 = vunpack.c.l.b16 %v94
    %v337 = vunpack.c.l.b16 %v95
    %v338 = vunpack.c.h.b16 %v95
    %v339 = vunpack.c.l.b16 %v96
    %v340 = vunpack.c.l.b16 %v97
    %v341 = vunpack.c.h.b16 %v97
    %v342 = vunpack.c.l.b16 %v98
    %v343 = vunpack.c.l.b16 %v99
    %v344 = vunpack.c.h.b16 %v99
    %v345 = vunpack.c.l.b16 %v100
    %v346 = vunpack.c.l.b16 %v101
    %v347 = vunpack.c.h.b16 %v101
    %v348 = vunpack.c.l.b16 %v102
    %v349 = vunpack.c.l.b16 %v103
    %v350 = vunpack.c.h.b16 %v103
    %v351 = vunpack.c.l.b16 %v104
    %v352 = vunpack.c.l.b16 %v105
    %v353 = vunpack.c.h.b16 %v105
    %v354 = vunpack.c.l.b16 %v106
    %v355 = vunpack.c.l.b16 %v107
    %v356 = vunpack.c.h.b16 %v107
    %v357 = vunpack.c.l.b16 %v108
    %v358 = vunpack.c.l.b16 %v109
    %v359 = vunpack.c.h.b16 %v109
    %v360 = vunpack.c.l.b16 %v110
    %v361 = vunpack.c.l.b16 %v111
    %v362 = vunpack.c.h.b16 %v111
    %v363 = vunpack.c.l.b16 %v112
    %v364 = vunpack.c.l.b16 %v113
    %v365 = vunpack.c.h.b16 %v113
    %v366 = vunpack.c.l.b16 %v114
    %v367 = vunpack.c.l.b16 %v115
    %v368 = vunpack.c.h.b16 %v115
    %v369 = vunpack.c.l.b16 %v116
    %v370 = vunpack.c.l.b16 %v117
    %v371 = vunpack.c.h.b16 %v117
    %v372 = vunpack.c.l.b16 %v118
    %v373 = vunpack.c.l.b16 %v119
    %v374 = vunpack.c.h.b16 %v119
    %v375 = vunpack.c.l.b16 %v120
    %v376 = vunpack.c.l.b16 %v121
    %v377 = vunpack.c.h.b16 %v121
    %v378 = vunpack.c.l.b16 %v122
    %v379 = vunpack.c.l.b16 %v123
    %v380 = vunpack.c.h.b16 %v123
    %v381 = vunpack.c.l.b16 %v124
    %v382 = vunpack.c.l.b16 %v125
    %v383 = vunpack.c.h.b16 %v125
    %v384 = vunpack.c.l.b16 %v126
    %v385 = vunpack.c.l.b16 %v127
    %v386 = vunpack.c.h.b16 %v127
    %v387 = vunpack.c.l.b16 %v128
    %v388 = vunpack.c.l.b16 %v129
    %v389 = vunpack.c.h.b16 %v129
    %v390 = vunpack.c.l.b16 %v130
    %v391 = vunpack.c.l.b16 %v131
    %v392 = vunpack.c.h.b16 %v131
    %v393 = vunpack.c.l.b16 %v132
    %v394 = vunpack.c.l.b16 %v133
    %v395 = vunpack.c.h.b16 %v133
    %v396 = vunpack.c.l.b16 %v134
    %v397 = vunpack.c.l.b16 %v135
    %v398 = vunpack.c.h.b16 %v135
    %v399 = vunpack.c.l.b16 %v136
    %v400 = vunpack.c.l.b16 %v137
    %v401 = vunpack.c.h.b16 %v137
    %v402 = vunpack.c.l.b16 %v138
    %v403 = vunpack.c.l.b16 %v139
    %v404 = vunpack.c.h.b16 %v139
    %v405 = vunpack.c.l.b16 %v140
    %v406 = vunpack.c.l.b16 %v141
    %v407 = vunpack.c.h.b16 %v141
    %v408 = vunpack.c.l.b16 %v142
    %v409 = vunpack.c.l.b16 %v143
    %v410 = vunpack.c.h.b16 %v143
    %v411 = vunpack.c.l.b16 %v144
    %v412 = vunpack.c.l.b16 %v145
    %v413 = vunpack.c.h.b16 %v145
    %v414 = vunpack.c.l.b16 %v146
    %v415 = vpack.c.b16 %v274, %v271
    %v416 = vpack.c.b16 %v275, %v272
    %v417 = vpack.c.b16 %v276, %v273
    %v418 = vpack.c.b16 %v280, %v277
    %v419 = vpack.c.b16 %v281, %v278
    %v420 = vpack.c.b16 %v282, %v279
    %v421 = vpack.c.b16 %v286, %v283
    %v422 = vpack.c.b16 %v287, %v284
    %v423 = vpack.c.b16 %v288, %v285
    %v424 = vpack.c.b16 %v292, %v289
    %v425 = vpack.c.b16 %v293, %v290
    %v426 = vpack.c.b16 %v294, %v291
    %v427 = vpack.c.b16 %v298, %v295
    %v428 = vpack.c.b16 %v299, %v296
    %v429 = vpack.c.b16 %v300, %v297
    %v430 = vpack.c.b16 %v304, %v301
    %v431 = vpack.c.b16 %v305, %v302
    %v432 = vpack.c.b16 %v306, %v303
    %v433 = vpack.c.b16 %v310, %v307
    %v434 = vpack.c.b16 %v311, %v308
    %v435 = vpack.c.b16 %v312, %v309
    %v436 = vpack.c.b16 %v316, %v313
    %v437 = vpack.c.b16 %v317, %v314
    %v438 = vpack.c.b16 %v318, %v315
    %v439 = vpack.c.b16 %v322, %v319
    %v440 = vpack.c.b16 %v323, %v320
    %v441 = vpack.c.b16 %v324, %v321
    %v442 = vpack.c.b16 %v328, %v325
    %v443 = vpack.c.b16 %v329, %v326
    %v444 = vpack.c.b16 %v330, %v327
    %v445 = vpack.c.b16 %v334, %v331
    %v446 = vpack.c.b16 %v335, %v332
    %v447 = vpack.c.b16 %v336, %v333
    %v448 = vpack.c.b16 %v340, %v337
    %v449 = vpack.c.b16 %v341, %v338
    %v450 = vpack.c.b16 %v342, %v339
    %v451 = vpack.c.b16 %v346, %v343
    %v452 = vpack.c.b16 %v347, %v344
    %v453 = vpack.c.b16 %v348, %v345
    %v454 = vpack.c.b16 %v352, %v349
    %v455 = vpack.c.b16 %v353, %v350
    %v456 = vpack.c.b16 %v354, %v351
    %v457 = vpack.c.b16 %v358, %v355
    %v458 = vpack.c.b16 %v359, %v356
    %v459 = vpack.c.b16 %v360, %v357
    %v460 = vpack.c.b16 %v364, %v361
    %v461 = vpack.c.b16 %v365, %v362
    %v462 = vpack.c.b16 %v366, %v363
    %v463 = vpack.c.b16 %v370, %v367
    %v464 = vpack.c.b16 %v371, %v368
    %v465 = vpack.c.b16 %v372, %v369
    %v466 = vpack.c.b16 %v376, %v373
    %v467 = vpack.c.b16 %v377, %v374
    %v468 = vpack.c.b16 %v378, %v375
    %v469 = vpack.c.b16 %v382, %v379
    %v470 = vpack.c.b16 %v383, %v380
    %v471 = vpack.c.b16 %v384, %v381
    %v472 = vpack.c.b16 %v388, %v385
    %v473 = vpack.c.b16 %v389, %v386
    %v474 = vpack.c.b16 %v390, %v387
    %v475 = vpack.c.b16 %v394, %v391
    %v476 = vpack.c.b16 %v395, %v392
    %v477 = vpack.c.b16 %v396, %v393
    %v478 = vpack.c.b16 %v400, %v397
    %v479 = vpack.c.b16 %v401, %v398
    %v480 = vpack.c.b16 %v402, %v399
    %v481 = vpack.c.b16 %v406, %v403
    %v482 = vpack.c.b16 %v407, %v404
    %v483 = vpack.c.b16 %v408, %v405
    %v484 = vpack.c.b16 %v412, %v409
    %v485 = vpack.c.b16 %v413, %v410
    %v486 = vpack.c.b16 %v414, %v411
    %559 = vmatprep.subr.bf16.mxu0 %v416
    %560 = vmatpush1.bf16.msra.mxu0 %v415
    %561 = vmatprep.subr.bf16.mxu0 %v419
    %562 = vmatpush1.bf16.msra.mxu0 %v418
    %563 = vmatprep.subr.bf16.mxu0 %v422
    %564 = vmatpush1.bf16.msra.mxu0 %v421
    %565 = vmatprep.subr.bf16.mxu0 %v425
    %566 = vmatpush1.bf16.msra.mxu0 %v424
    %567 = vmatprep.subr.bf16.mxu0 %v428
    %568 = vmatpush1.bf16.msra.mxu0 %v427
    %569 = vmatprep.subr.bf16.mxu0 %v431
    %570 = vmatpush1.bf16.msra.mxu0 %v430
    %571 = vmatprep.subr.bf16.mxu0 %v434
    %572 = vmatpush1.bf16.msra.mxu0 %v433
    %573 = vmatprep.subr.bf16.mxu0 %v437
    %574 = vmatpush1.bf16.msra.mxu0 %v436
    %575 = vmatprep.subr.bf16.mxu0 %v440
    %576 = vmatpush1.bf16.msra.mxu0 %v439
    %577 = vmatprep.subr.bf16.mxu0 %v443
    %578 = vmatpush1.bf16.msra.mxu0 %v442
    %579 = vmatprep.subr.bf16.mxu0 %v446
    %580 = vmatpush1.bf16.msra.mxu0 %v445
    %581 = vmatprep.subr.bf16.mxu0 %v449
    %582 = vmatpush1.bf16.msra.mxu0 %v448
    %583 = vmatprep.subr.bf16.mxu0 %v452
    %584 = vmatpush1.bf16.msra.mxu0 %v451
    %585 = vmatprep.subr.bf16.mxu0 %v455
    %586 = vmatpush1.bf16.msra.mxu0 %v454
    %587 = vmatprep.subr.bf16.mxu0 %v458
    %588 = vmatpush1.bf16.msra.mxu0 %v457
    %589 = vmatprep.subr.bf16.mxu0 %v461
    %590 = vmatpush1.bf16.msra.mxu0 %v460
    %591 = vmatprep.mubr.bf16.mxu0 %v170
    %592 = vmatmul.mubr.bf16.gmra.mrb[0].mxu0 %v169
    %v593 = vpop.f32.mrb[0].mxu0
    %v594 = vadd.f32 %v152, %v593
    %v595 = vpop.f32.mrb[0].mxu0
    %v596 = vadd.f32 %v156, %v595
    %v597 = vpop.f32.mrb[0].mxu0
    %v598 = vpop.f32.mrb[0].mxu0
    %599 = vdwg.mxu0
    %600 = vmatprep.subr.bf16.mxu0 %v464
    %601 = vmatpush1.bf16.msra.mxu0 %v463
    %602 = vmatprep.subr.bf16.mxu0 %v467
    %603 = vmatpush1.bf16.msra.mxu0 %v466
    %604 = vmatprep.subr.bf16.mxu0 %v470
    %605 = vmatpush1.bf16.msra.mxu0 %v469
    %606 = vmatprep.subr.bf16.mxu0 %v473
    %607 = vmatpush1.bf16.msra.mxu0 %v472
    %608 = vmatprep.subr.bf16.mxu0 %v476
    %609 = vmatpush1.bf16.msra.mxu0 %v475
    %610 = vmatprep.subr.bf16.mxu0 %v479
    %611 = vmatpush1.bf16.msra.mxu0 %v478
    %612 = vmatprep.subr.bf16.mxu0 %v482
    %613 = vmatpush1.bf16.msra.mxu0 %v481
    %614 = vmatprep.subr.bf16.mxu0 %v485
    %615 = vmatpush1.bf16.msra.mxu0 %v484
    %616 = vmatprep.subr.bf16.mxu0 0
    %617 = vmatpush1.bf16.msra.mxu0 0
    %618 = vmatprep.subr.bf16.mxu0 0
    %619 = vmatpush1.bf16.msra.mxu0 0
    %620 = vmatprep.subr.bf16.mxu0 0
    %621 = vmatpush1.bf16.msra.mxu0 0
    %622 = vmatprep.subr.bf16.mxu0 0
    %623 = vmatpush1.bf16.msra.mxu0 0
    %624 = vmatprep.subr.bf16.mxu0 0
    %625 = vmatpush1.bf16.msra.mxu0 0
    %626 = vmatprep.subr.bf16.mxu0 0
    %627 = vmatpush1.bf16.msra.mxu0 0
    %628 = vmatprep.subr.bf16.mxu0 0
    %629 = vmatpush1.bf16.msra.mxu0 0
    %630 = vmatprep.subr.bf16.mxu0 0
    %631 = vmatpush1.bf16.msra.mxu0 0
    %632 = vmatprep.mubr.bf16.mxu0 0
    %633 = vmatmul.mubr.bf16.gmra.mrb[0].mxu0 %v171
    %v634 = vpop.f32.mrb[0].mxu0
    %v635 = vadd.f32 %v594, %v634
    %v636 = vpop.f32.mrb[0].mxu0
    %v637 = vadd.f32 %v596, %v636
    %v638 = vpop.f32.mrb[0].mxu0
    %v639 = vpop.f32.mrb[0].mxu0
    %640 = vdwg.mxu0
    %641 = vmatprep.subr.bf16.mxu0 0
    %642 = vmatpush1.bf16.msra.mxu0 %v417
    %643 = vmatprep.subr.bf16.mxu0 0
    %644 = vmatpush1.bf16.msra.mxu0 %v420
    %645 = vmatprep.subr.bf16.mxu0 0
    %646 = vmatpush1.bf16.msra.mxu0 %v423
    %647 = vmatprep.subr.bf16.mxu0 0
    %648 = vmatpush1.bf16.msra.mxu0 %v426
    %649 = vmatprep.subr.bf16.mxu0 0
    %650 = vmatpush1.bf16.msra.mxu0 %v429
    %651 = vmatprep.subr.bf16.mxu0 0
    %652 = vmatpush1.bf16.msra.mxu0 %v432
    %653 = vmatprep.subr.bf16.mxu0 0
    %654 = vmatpush1.bf16.msra.mxu0 %v435
    %655 = vmatprep.subr.bf16.mxu0 0
    %656 = vmatpush1.bf16.msra.mxu0 %v438
    %657 = vmatprep.subr.bf16.mxu0 0
    %658 = vmatpush1.bf16.msra.mxu0 %v441
    %659 = vmatprep.subr.bf16.mxu0 0
    %660 = vmatpush1.bf16.msra.mxu0 %v444
    %661 = vmatprep.subr.bf16.mxu0 0
    %662 = vmatpush1.bf16.msra.mxu0 %v447
    %663 = vmatprep.subr.bf16.mxu0 0
    %664 = vmatpush1.bf16.msra.mxu0 %v450
    %665 = vmatprep.subr.bf16.mxu0 0
    %666 = vmatpush1.bf16.msra.mxu0 %v453
    %667 = vmatprep.subr.bf16.mxu0 0
    %668 = vmatpush1.bf16.msra.mxu0 %v456
    %669 = vmatprep.subr.bf16.mxu0 0
    %670 = vmatpush1.bf16.msra.mxu0 %v459
    %671 = vmatprep.subr.bf16.mxu0 0
    %672 = vmatpush1.bf16.msra.mxu0 %v462
    %673 = vmatprep.mubr.bf16.mxu0 %v170
    %674 = vmatmul.mubr.bf16.gmra.mrb[0].mxu0 %v169
    %v675 = vpop.f32.mrb[0].mxu0
    %v676 = vadd.f32 %v160, %v675
    %v677 = vpop.f32.mrb[0].mxu0
    %v678 = vpop.f32.mrb[0].mxu0
    %v679 = vpop.f32.mrb[0].mxu0
    %680 = vdwg.mxu0
    %681 = vmatprep.subr.bf16.mxu0 0
    %682 = vmatpush1.bf16.msra.mxu0 %v465
    %683 = vmatprep.subr.bf16.mxu0 0
    %684 = vmatpush1.bf16.msra.mxu0 %v468
    %685 = vmatprep.subr.bf16.mxu0 0
    %686 = vmatpush1.bf16.msra.mxu0 %v471
    %687 = vmatprep.subr.bf16.mxu0 0
    %688 = vmatpush1.bf16.msra.mxu0 %v474
    %689 = vmatprep.subr.bf16.mxu0 0
    %690 = vmatpush1.bf16.msra.mxu0 %v477
    %691 = vmatprep.subr.bf16.mxu0 0
    %692 = vmatpush1.bf16.msra.mxu0 %v480
    %693 = vmatprep.subr.bf16.mxu0 0
    %694 = vmatpush1.bf16.msra.mxu0 %v483
    %695 = vmatprep.subr.bf16.mxu0 0
    %696 = vmatpush1.bf16.msra.mxu0 %v486
    %697 = vmatprep.subr.bf16.mxu0 0
    %698 = vmatpush1.bf16.msra.mxu0 0
    %699 = vmatprep.subr.bf16.mxu0 0
    %700 = vmatpush1.bf16.msra.mxu0 0
    %701 = vmatprep.subr.bf16.mxu0 0
    %702 = vmatpush1.bf16.msra.mxu0 0
    %703 = vmatprep.subr.bf16.mxu0 0
    %704 = vmatpush1.bf16.msra.mxu0 0
    %705 = vmatprep.subr.bf16.mxu0 0
    %706 = vmatpush1.bf16.msra.mxu0 0
    %707 = vmatprep.subr.bf16.mxu0 0
    %708 = vmatpush1.bf16.msra.mxu0 0
    %709 = vmatprep.subr.bf16.mxu0 0
    %710 = vmatpush1.bf16.msra.mxu0 0
    %711 = vmatprep.subr.bf16.mxu0 0
    %712 = vmatpush1.bf16.msra.mxu0 0
    %713 = vmatprep.mubr.bf16.mxu0 0
    %714 = vmatmul.mubr.bf16.gmra.mrb[0].mxu0 %v171
    %v715 = vpop.f32.mrb[0].mxu0
    %v716 = vadd.f32 %v676, %v715
    %v717 = vpop.f32.mrb[0].mxu0
    %v718 = vpop.f32.mrb[0].mxu0
    %v719 = vpop.f32.mrb[0].mxu0
    %720 = vdwg.mxu0
    %v721 = vxor.u32 %v635, 2147483648
    %v722 = vmul.f32 %v721, 1.442695
    %v723 = vpow.pop %v722
    %v724 = vadd.f32 %v723, 1.0
    %v725 = vrcp.pop %v724
    %v726 = vmul.f32 1.0, %v725
    %v727 = vtanh.pop %v637
    %v728 = vxor.u32 %v716, 2147483648
    %v729 = vmul.f32 %v728, 1.442695
    %v730 = vpow.pop %v729
    %v731 = vadd.f32 %v730, 1.0
    %v732 = vrcp.pop %v731
    %v733 = vmul.f32 1.0, %v732
    %v734 = vmul.f32 %v726, %v727
    %v735 = vtanh.pop %v734
    %v736 = vmul.f32 %v733, %v735
    %v737 = vld [vmem:[%s3] sm:$0x1]
    %v739 = vlaneseq
    %v740 = vshrl.u32 %v739, 7
    %v741 = vsub.s32 0, %v740
    %v742 = vrot.slane %v737, %v741
    %v744 = vmul.f32 %v736, %v742
    %745 = vadd.xlane.f32.xlu0 %v744
    %v746 = vpop.xlane.xlu0 %745
    %v747 = vld [vmem:[#allocation2] sm:$0x1]
    %v749 = vlaneseq
    %v750 = vshrl.u32 %v749, 7
    %v751 = vsub.s32 0, %v750
    %v752 = vrot.slane %v747, %v751
    %v754 = vadd.f32 %v746, %v752
    %vm755 = vcmask 7168
    %756 = vst.msk [vmem:[%s5] sm:$0xff] %vm755, %v754
    // Predicated region
    $region30: #{tpu_custom_call.1} parent=1 // pred_check
      _
    $region31: #{tpu_custom_call.1} parent=1 // pred_check_branch
      %758 = sbr.rel (0) target = $region33
    $region32: #{tpu_custom_call.1} parent=1 // pred_region
      _
    $region33: #{tpu_custom_call.1} parent=1 // pred_fallthru
      _
    // Predicated region
    $region34: #{tpu_custom_call.1} parent=1 // pred_check
      _
    $region35: #{tpu_custom_call.1} parent=1 // pred_check_branch
      %760 = sbr.rel (0) target = $region37
    $region36: #{tpu_custom_call.1} parent=1 // pred_region
      _
    $region37: #{tpu_custom_call.1} parent=1 // pred_fallthru
      _
    %761 = vsyncpa [#allocation4], 1
    %762 = vsyncpa [#allocation6], 1

</llo_original>
